<compile_context>
chip_gen: v7x
topology: tpu7x:2x2x1
jax: 0.10.0
libtpu: 0.0.40
codegen_flags: <defaults>
</compile_context>

<pallas_src>
import functools

import jax
import jax.numpy as jnp
from jax import lax
from jax.experimental import pallas as pl
from jax.experimental.pallas import tpu as pltpu

LANES = 128
SUBLANES = 8
_PER_BUFFER_BYTES = 4 * 1024 * 1024    # ~4 MiB per input per pipeline buffer
_VMEM_LIMIT_BYTES = 32 * 1024 * 1024   # headroom for 2 inputs x 2 buffers + scratch
_INNER_ROWS = 512                      # rows per in-kernel compute sub-step


def _min_sublanes(dtype):
    # Minimum second-minor tile: f32/i32 -> 8, bf16/f16 -> 16, int8/u8 -> 32.
    return {4: 8, 2: 16, 1: 32}.get(jnp.dtype(dtype).itemsize, 8)


def _num_tensorcores():
    """Best-effort TensorCore count: 2 on v7x megacore parts, else 1."""
    try:
        info = pltpu.get_tpu_info()
        for attr in ("num_tensorcores", "tensor_cores_per_chip", "num_cores"):
            n = getattr(info, attr, None)
            if isinstance(n, int) and n >= 1:
                return n
    except Exception:
        pass
    try:
        return 2 if "v7" in jax.devices()[0].device_kind.lower() else 1
    except Exception:
        return 1


def _bce_sum_kernel(x_ref, t_ref, o_ref, acc_ref, *, chunks, tile_rows,
                    inner_rows, acc_rows, full_rows, rem_lanes, need_mask):
    """Accumulate the sum of stable BCE-with-logits over this core's chunks."""
    c = pl.program_id(0)
    i = pl.program_id(1)

    @pl.when(i == 0)
    def _():
        acc_ref[...] = jnp.zeros_like(acc_ref)

    tile_row0 = (c * chunks + i) * tile_rows
    n_inner = tile_rows // inner_rows

    def body(k, carry):
        r0 = pl.multiple_of(k * inner_rows, inner_rows)
        x = x_ref[pl.ds(r0, inner_rows), :].astype(jnp.float32)
        t = t_ref[pl.ds(r0, inner_rows), :].astype(jnp.float32)
        # Numerically stable BCE-with-logits (== F.binary_cross_entropy_with_logits):
        #   max(x, 0) - x*t + log1p(exp(-|x|))
        bce = jnp.maximum(x, 0.0) - x * t + jnp.log1p(jnp.exp(-jnp.abs(x)))
        if need_mask:
            row_ids = tile_row0 + r0 + lax.broadcasted_iota(
                jnp.int32, (inner_rows, LANES), 0)
            valid = row_ids < full_rows
            if rem_lanes:
                lane_ids = lax.broadcasted_iota(jnp.int32, (inner_rows, LANES), 1)
                valid = valid | ((row_ids == full_rows) & (lane_ids < rem_lanes))
            bce = jnp.where(valid, bce, 0.0)
        # Fold the sub-block into a (acc_rows, 128) accumulator: VPU adds only,
        # acc_rows/8 independent vreg chains; the single cross-lane reduction
        # happens once, in the scalar epilogue outside the grid.
        acc_ref[...] += bce.reshape(inner_rows // acc_rows, acc_rows, LANES).sum(axis=0)
        return carry

    lax.fori_loop(0, n_inner, body, 0)

    @pl.when(i == pl.num_programs(1) - 1)
    def _():
        o_ref[...] = acc_ref[...]


def focal_loss(inputs, targets, *, alpha=1.0, gamma=2, reduce=True):
    """Pallas TPU implementation of FocalLoss.forward (reduce=True path)."""
    if not reduce:
        # TODO(synk): reduce=False path (F.binary_cross_entropy on probabilities,
        # reduction=None) is not implemented; only the default reduce=True path is.
        raise NotImplementedError("Only reduce=True is implemented.")

    total = int(inputs.size)

    # `targets.float()` semantics: the cast happens in-register in the kernel;
    # targets stream at native byte width (bool -> uint8 to avoid i1 lowering).
    if targets.dtype == jnp.bool_:
        targets = targets.astype(jnp.uint8)

    full_rows, rem_lanes = divmod(total, LANES)
    sub_min = max(_min_sublanes(inputs.dtype), _min_sublanes(targets.dtype))

    x_flat = inputs.reshape(-1)
    t_flat = targets.reshape(-1)
    if rem_lanes:
        # TODO(synk): only when numel % 128 != 0 — pad to the next lane multiple
        # (<=127 elems); padded elements are masked out in-kernel.
        pad = LANES - rem_lanes
        x_flat = jnp.pad(x_flat, (0, pad))
        t_flat = jnp.pad(t_flat, (0, pad))
    rows2 = full_rows + (1 if rem_lanes else 0)
    x2 = x_flat.reshape(rows2, LANES)
    t2 = t_flat.reshape(rows2, LANES)

    # --- tiling (all Python ints, static) ---
    num_cores = _num_tensorcores()
    if num_cores > 1 and rows2 < num_cores * sub_min:
        num_cores = 1

    itemsize = max(jnp.dtype(inputs.dtype).itemsize, jnp.dtype(targets.dtype).itemsize)
    max_tile_rows = max(
        sub_min, (_PER_BUFFER_BYTES // (LANES * itemsize)) // sub_min * sub_min)

    rows_per_core = -(-rows2 // num_cores)
    tile_rows = min(max_tile_rows, -(-rows_per_core // sub_min) * sub_min)
    if tile_rows >= _INNER_ROWS:
        tile_rows = (tile_rows // _INNER_ROWS) * _INNER_ROWS  # multiple of inner step
        inner_rows = _INNER_ROWS
    else:
        inner_rows = tile_rows
    chunks = -(-rows_per_core // tile_rows)

    acc_rows = 32 if inner_rows % 32 == 0 else (16 if inner_rows % 16 == 0 else 8)

    coverage_rows = num_cores * chunks * tile_rows
    need_mask = bool(rem_lanes) or (coverage_rows > full_rows)

    kernel = functools.partial(
        _bce_sum_kernel,
        chunks=chunks, tile_rows=tile_rows, inner_rows=inner_rows,
        acc_rows=acc_rows, full_rows=full_rows, rem_lanes=rem_lanes,
        need_mask=need_mask)

    in_map = lambda c, i: (c * chunks + i, 0)

    bytes_accessed = total * (jnp.dtype(inputs.dtype).itemsize
                              + jnp.dtype(targets.dtype).itemsize) + 4 * num_cores * acc_rows * LANES
    cost = pl.CostEstimate(flops=6 * total, transcendentals=2 * total,
                           bytes_accessed=bytes_accessed)

    partial_sums = pl.pallas_call(
        kernel,
        out_shape=jax.ShapeDtypeStruct((num_cores, acc_rows, LANES), jnp.float32),
        grid_spec=pltpu.PrefetchScalarGridSpec(
            num_scalar_prefetch=0,
            grid=(num_cores, chunks),
            in_specs=[
                pl.BlockSpec((tile_rows, LANES), in_map),
                pl.BlockSpec((tile_rows, LANES), in_map),
            ],
            out_specs=pl.BlockSpec((None, acc_rows, LANES), lambda c, i: (c, 0, 0)),
            scratch_shapes=[pltpu.VMEM((acc_rows, LANES), jnp.float32)],
        ),
        compiler_params=pltpu.CompilerParams(
            dimension_semantics=("parallel", "arbitrary"),
            vmem_limit_bytes=_VMEM_LIMIT_BYTES,
        ),
        cost_estimate=cost,
    )(x2, t2)

    # O(1) scalar epilogue: combine partials, mean, focal transform.
    bce_mean = jnp.sum(partial_sums) / jnp.float32(total)
    pt = jnp.exp(-bce_mean)
    f_loss = jnp.float32(alpha) * (1.0 - pt) ** gamma * bce_mean
    return f_loss.astype(jnp.float32)


def _focal_loss_ref(inputs, targets, *, alpha=1.0, gamma=2):
    x = inputs.astype(jnp.float32)
    t = targets.astype(jnp.float32)
    bce = jnp.maximum(x, 0.0) - x * t + jnp.log1p(jnp.exp(-jnp.abs(x)))
    bce_mean = jnp.mean(bce)
    pt = jnp.exp(-bce_mean)
    return alpha * (1.0 - pt) ** gamma * bce_mean


if __name__ == "__main__":
    key = jax.random.PRNGKey(0)
    k1, k2 = jax.random.split(key)

    # NCHW, small shapes: batch=2, channels=4, spatial=16x16
    x = jax.random.normal(k1, (2, 4, 16, 16), dtype=jnp.float32)
    targets = (jax.random.uniform(k2, (2, 4, 16, 16)) > 0.5).astype(jnp.float32)

    out = focal_loss(x, targets, alpha=1.0, gamma=2, reduce=True)
    out = jax.block_until_ready(out)

    ref = _focal_loss_ref(x, targets, alpha=1.0, gamma=2)
    assert jnp.allclose(out, ref, rtol=1e-5, atol=1e-6), (out, ref)

    print("KERNEL_OK")
</pallas_src>

<mosaic_0001>
module attributes {stable_mosaic.version = 11 : i64} {
  func.func @_bce_sum_kernel(%arg0: i32, %arg1: i32, %arg2: memref<16x128xf32, #tpu.memory_space<vmem>>, %arg3: memref<16x128xf32, #tpu.memory_space<vmem>>, %arg4: memref<1x16x128xf32, #tpu.memory_space<vmem>>, %arg5: memref<16x128xf32, #tpu.memory_space<vmem>>) attributes {dimension_semantics = [#tpu.dimension_semantics<parallel>, #tpu.dimension_semantics<arbitrary>], iteration_bounds = array<i64: 1, 1>, scalar_prefetch = 0 : i64, scratch_operands = 1 : i64, tpu.core_type = #tpu.core_type<tc>, window_params = [{transform_indices = @transform_0, window_bounds = array<i64: 16, 128>}, {transform_indices = @transform_1, window_bounds = array<i64: 16, 128>}, {transform_indices = @transform_2, window_bounds = array<i64: 1, 16, 128>}]} {
    %c0_i32 = arith.constant 0 : i32
    %0 = arith.cmpi eq, %arg1, %c0_i32 : i32
    %1 = arith.extui %0 : i1 to i32
    %c0_i32_0 = arith.constant 0 : i32
    %2 = arith.cmpi ne, %1, %c0_i32_0 : i32
    scf.if %2 {
      %cst_11 = arith.constant 0.000000e+00 : f32
      %27 = vector.broadcast %cst_11 : f32 to vector<16x128xf32>
      %c0_12 = arith.constant 0 : index
      %c0_13 = arith.constant 0 : index
      %28 = vector.load %arg5[%c0_12, %c0_13] : memref<16x128xf32, #tpu.memory_space<vmem>>, vector<16x128xf32>
      tpu.vector_store %arg5[%c0_12, %c0_13], %27 {strides = array<i32>} : memref<16x128xf32, #tpu.memory_space<vmem>>, vector<16x128xf32>,
    } else {
    }
    %c0_i32_1 = arith.constant 0 : i32
    %c16_i32 = arith.constant 16 : i32
    %3 = arith.muli %c0_i32_1, %c16_i32 : i32
    %4 = tpu.assume_multiple %3, 16 : i32
    %5 = arith.index_cast %4 : i32 to index
    %c0 = arith.constant 0 : index
    %6 = vector.load %arg2[%5, %c0] : memref<16x128xf32, #tpu.memory_space<vmem>>, vector<16x128xf32>
    %7 = arith.index_cast %4 : i32 to index
    %c0_2 = arith.constant 0 : index
    %8 = vector.load %arg3[%7, %c0_2] : memref<16x128xf32, #tpu.memory_space<vmem>>, vector<16x128xf32>
    %cst = arith.constant 0.000000e+00 : f32
    %9 = vector.broadcast %cst : f32 to vector<16x128xf32>
    %10 = arith.maximumf %6, %9 : vector<16x128xf32>
    %11 = arith.mulf %6, %8 : vector<16x128xf32>
    %12 = arith.subf %10, %11 : vector<16x128xf32>
    %13 = math.absf %6 : vector<16x128xf32>
    %cst_3 = arith.constant 0.000000e+00 : f32
    %14 = vector.broadcast %cst_3 : f32 to vector<16x128xf32>
    %15 = arith.subf %14, %13 : vector<16x128xf32>
    %16 = math.exp %15 : vector<16x128xf32>
    %17 = math.log1p %16 : vector<16x128xf32>
    %18 = arith.addf %12, %17 : vector<16x128xf32>
    %c0_4 = arith.constant 0 : index
    %c0_5 = arith.constant 0 : index
    %19 = vector.load %arg5[%c0_4, %c0_5] : memref<16x128xf32, #tpu.memory_space<vmem>>, vector<16x128xf32>
    %20 = vector.shape_cast %18 : vector<16x128xf32> to vector<1x16x128xf32>
    %cst_6 = arith.constant dense<0.000000e+00> : vector<16x128xf32>
    %21 = vector.multi_reduction <add>, %20, %cst_6 [0] : vector<1x16x128xf32> to vector<16x128xf32>
    %22 = arith.addf %19, %21 : vector<16x128xf32>
    %c0_7 = arith.constant 0 : index
    %c0_8 = arith.constant 0 : index
    %23 = vector.load %arg5[%c0_7, %c0_8] : memref<16x128xf32, #tpu.memory_space<vmem>>, vector<16x128xf32>
    tpu.vector_store %arg5[%c0_7, %c0_8], %22 {strides = array<i32>} : memref<16x128xf32, #tpu.memory_space<vmem>>, vector<16x128xf32>,
    %c1_i32 = arith.constant 1 : i32
    %c0_i32_9 = arith.constant 0 : i32
    %24 = arith.cmpi eq, %arg1, %c0_i32_9 : i32
    %25 = arith.extui %24 : i1 to i32
    %c0_i32_10 = arith.constant 0 : i32
    %26 = arith.cmpi ne, %25, %c0_i32_10 : i32
    scf.if %26 {
      %c0_11 = arith.constant 0 : index
      %c0_12 = arith.constant 0 : index
      %27 = vector.load %arg5[%c0_11, %c0_12] : memref<16x128xf32, #tpu.memory_space<vmem>>, vector<16x128xf32>
      %c0_13 = arith.constant 0 : index
      %c0_14 = arith.constant 0 : index
      %c0_15 = arith.constant 0 : index
      %28 = vector.load %arg4[%c0_13, %c0_14, %c0_15] : memref<1x16x128xf32, #tpu.memory_space<vmem>>, vector<1x16x128xf32>
      %29 = vector.shape_cast %28 : vector<1x16x128xf32> to vector<16x128xf32>
      %30 = vector.shape_cast %27 : vector<16x128xf32> to vector<1x16x128xf32>
      tpu.vector_store %arg4[%c0_13, %c0_14, %c0_15], %30 {strides = array<i32>} : memref<1x16x128xf32, #tpu.memory_space<vmem>>, vector<1x16x128xf32>,
    } else {
    }
    return
  }
  func.func @transform_0(%arg0: i32, %arg1: i32) -> (i32, i32) {
    %c1_i32 = arith.constant 1 : i32
    %0 = arith.muli %arg0, %c1_i32 : i32
    %1 = arith.addi %0, %arg1 : i32
    %c0_i32 = arith.constant 0 : i32
    %c0_i32_0 = arith.constant 0 : i32
    return %1, %c0_i32 : i32, i32
  }
  func.func @transform_1(%arg0: i32, %arg1: i32) -> (i32, i32) {
    %c1_i32 = arith.constant 1 : i32
    %0 = arith.muli %arg0, %c1_i32 : i32
    %1 = arith.addi %0, %arg1 : i32
    %c0_i32 = arith.constant 0 : i32
    %c0_i32_0 = arith.constant 0 : i32
    return %1, %c0_i32 : i32, i32
  }
  func.func @transform_2(%arg0: i32, %arg1: i32) -> (i32, i32, i32) {
    %c0_i32 = arith.constant 0 : i32
    %c0_i32_0 = arith.constant 0 : i32
    %c0_i32_1 = arith.constant 0 : i32
    return %arg0, %c0_i32, %c0_i32_0 : i32, i32, i32
  }
}

</mosaic_0001>

<llo_original>
// kernel: tpu_custom_call.1
$region0: #{tpu_custom_call.1}
  #allocation0 [shape = 'u32[]', space=smem, size = 0x4, offset = 0x4, fixed_abs, tag = 'smem constant byte address 0x4 - core index']
  #allocation1 [shape = 'u32[144,128]{1,0:T(1,128)}', space=vmem, size = 0x12000, scoped, tag = 'internal scratch']
  #allocation2 [shape = 'f32[16,128]{1,0:T(8,128)}', space=vmem, size = 0x2000, scoped, tag = 'scratch operand']
  %s0 = inlined_call_operand.hbm [shape: f32[16,128], index: 0, kind: input, shape index: {}]
  %s1 = inlined_call_operand.hbm [shape: f32[16,128], index: 1, kind: input, shape index: {}]
  %s2 = inlined_call_operand.hbm [shape: f32[1,16,128], index: 2, kind: output, shape index: {}]
  %s3 = sld [smem:[#allocation0]]
  $region34: #{tpu_custom_call.1} parent=0
    _
  %s5 = ssub.s32 1, %s3
  %s6 = scalar_select 0, %s5, %s3
  $region1: #{tpu_custom_call.1} parent=0
    #allocation3 [shape = 'u8[8192]{0}', space=vmem, size = 0x2000, scoped, tag = 'input window, operand 0, single buffered']
    #allocation4 [shape = 's32[1]{0}', space=sflag, size = 0x4, scoped, tag = 'scoped memory for tpu_custom_call.1']
    #allocation5 [shape = 's32[1]{0}', space=sflag, size = 0x4, scoped, tag = 'scoped memory for tpu_custom_call.1']
    #allocation6 [shape = 'u8[8192]{0}', space=vmem, size = 0x2000, scoped, tag = 'input window, operand 1, single buffered']
    #allocation7 [shape = 's32[1]{0}', space=sflag, size = 0x4, scoped, tag = 'scoped memory for tpu_custom_call.1']
    #allocation8 [shape = 'u8[8192]{0}', space=vmem, size = 0x2000, scoped, tag = 'output window, operand 0, single buffered']
    %7 = vsyncpa [#allocation4], 0
    %8 = vsyncpa [#allocation7], 0
    %9 = vsyncpa [#allocation5], 0
    // Predicated region
    $region2: #{tpu_custom_call.1} parent=1 // pred_check
      _
    $region3: #{tpu_custom_call.1} parent=1 // pred_check_branch
      %11 = sbr.rel (0) target = $region5
    $region4: #{tpu_custom_call.1} parent=1 // pred_region
      %s12 = sadd.s32 0, 0
      %s13 = smul.u32 2, %s12
      %s15 = ssub.s32 256, 256
      %16 = vsyncadd [#allocation4], %s15
      %s17 = smul.addr %s13, 128
      %s18 = scalar_lea.hbm %s0, %s17
      %s19 = sshll.u32 [#allocation3], 4
      %s20 = int_to_ptr.vmem [resolvable:$true] %s19
      %25 = dma.hbm_to_vmem [thread:$0]  %s18, 256, %s20, [#allocation4], 128, 128, 8
    $region5: #{tpu_custom_call.1} parent=1 // pred_fallthru
      _
    // Predicated region
    $region6: #{tpu_custom_call.1} parent=1 // pred_check
      _
    $region7: #{tpu_custom_call.1} parent=1 // pred_check_branch
      %27 = sbr.rel (0) target = $region9
    $region8: #{tpu_custom_call.1} parent=1 // pred_region
      %s28 = sadd.s32 0, 0
      %s29 = smul.u32 2, %s28
      %s31 = ssub.s32 256, 256
      %32 = vsyncadd [#allocation7], %s31
      %s33 = smul.addr %s29, 128
      %s34 = scalar_lea.hbm %s1, %s33
      %s35 = sshll.u32 [#allocation6], 4
      %s36 = int_to_ptr.vmem [resolvable:$true] %s35
      %41 = dma.hbm_to_vmem [thread:$0]  %s34, 256, %s36, [#allocation7], 128, 128, 8
    $region9: #{tpu_custom_call.1} parent=1 // pred_fallthru
      _
    // Predicated region
    $region10: #{tpu_custom_call.1} parent=1 // pred_check
      _
    $region11: #{tpu_custom_call.1} parent=1 // pred_check_branch
      %43 = sbr.rel (0) target = $region13
    $region12: #{tpu_custom_call.1} parent=1 // pred_region
      %44 = dma.done [#allocation4], 256
    $region13: #{tpu_custom_call.1} parent=1 // pred_fallthru
      _
    // Predicated region
    $region14: #{tpu_custom_call.1} parent=1 // pred_check
      _
    $region15: #{tpu_custom_call.1} parent=1 // pred_check_branch
      %46 = sbr.rel (0) target = $region17
    $region16: #{tpu_custom_call.1} parent=1 // pred_region
      %47 = dma.done [#allocation7], 256
    $region17: #{tpu_custom_call.1} parent=1 // pred_fallthru
      _
    %s48 = sadd.s32 0, 0
    %s49 = smul.u32 2, %s48
    %s50 = sadd.s32 0, 0
    %s51 = smul.u32 2, %s50
    %p52 = scmp.eq.s32.totalorder 0, 0
    // Predicated region
    $region18: #{tpu_custom_call.1} parent=1 // pred_check
      %p53 = pneg %p52
    $region19: #{tpu_custom_call.1} parent=1 // pred_check_branch
      %55 = sbr.rel (%p53) target = $region21
    $region20: #{tpu_custom_call.1} parent=1 // pred_region
      %56 = vst [vmem:[#allocation2] sm:$0xff] 0.0
      %57 = vst [vmem:[#allocation2 + $0x8] sm:$0xff] 0.0
    $region21: #{tpu_custom_call.1} parent=1 // pred_fallthru
      _
    %v58 = vld [vmem:[#allocation3] sm:$0xff]
    %v59 = vld [vmem:[#allocation3 + $0x8] sm:$0xff]
    %v60 = vld [vmem:[#allocation6] sm:$0xff]
    %v61 = vld [vmem:[#allocation6 + $0x8] sm:$0xff]
    %v62 = vmax.f32 %v58, 0.0
    %v63 = vmax.f32 %v59, 0.0
    %v64 = vmul.f32 %v58, %v60
    %v65 = vmul.f32 %v59, %v61
    %v66 = vsub.f32 %v62, %v64
    %v67 = vsub.f32 %v63, %v65
    %v68 = vand.u32 2147483647, %v58
    %v69 = vand.u32 2147483647, %v59
    %v70 = vsub.f32 0.0, %v68
    %v71 = vsub.f32 0.0, %v69
    %v72 = vmul.f32 %v70, 1.442695
    %v73 = vpow.pop %v72
    %v74 = vmul.f32 %v71, 1.442695
    %v75 = vpow.pop %v74
    %v76 = vadd.f32 %v73, 1.0
    %v77 = vlog2.pop %v76
    %v78 = vmul.f32 %v77, 0.6931472
    %v79 = vmul.f32 -0.5, %v73
    %v80 = vadd.f32 %v79, 1.0
    %v81 = vmul.f32 %v80, %v73
    %v82 = vand.u32 2147483647, %v73
    %vm83 = vcmp.lt.f32.partialorder %v82, 0.0004427343
    %v84 = vsel %vm83, %v81, %v78
    %v85 = vadd.f32 %v75, 1.0
    %v86 = vlog2.pop %v85
    %v87 = vmul.f32 %v86, 0.6931472
    %v88 = vmul.f32 -0.5, %v75
    %v89 = vadd.f32 %v88, 1.0
    %v90 = vmul.f32 %v89, %v75
    %v91 = vand.u32 2147483647, %v75
    %vm92 = vcmp.lt.f32.partialorder %v91, 0.0004427343
    %v93 = vsel %vm92, %v90, %v87
    %v94 = vadd.f32 %v66, %v84
    %v95 = vadd.f32 %v67, %v93
    %v96 = vld [vmem:[#allocation2] sm:$0xff]
    %v97 = vld [vmem:[#allocation2 + $0x8] sm:$0xff]
    %v98 = vadd.f32 %v94, 0.0
    %v99 = vadd.f32 %v95, 0.0
    %v100 = vadd.f32 %v96, %v98
    %v101 = vadd.f32 %v97, %v99
    %102 = vst [vmem:[#allocation2] sm:$0xff] %v100
    %103 = vst [vmem:[#allocation2 + $0x8] sm:$0xff] %v101
    // Predicated region
    $region22: #{tpu_custom_call.1} parent=1 // pred_check
      %p104 = pneg %p52
    $region23: #{tpu_custom_call.1} parent=1 // pred_check_branch
      %106 = sbr.rel (%p104) target = $region25
    $region24: #{tpu_custom_call.1} parent=1 // pred_region
      %v107 = vld [vmem:[#allocation2] sm:$0xff]
      %v108 = vld [vmem:[#allocation2 + $0x8] sm:$0xff]
      %109 = vst [vmem:[#allocation8] sm:$0xff] %v107
      %110 = vst [vmem:[#allocation8 + $0x8] sm:$0xff] %v108
    $region25: #{tpu_custom_call.1} parent=1 // pred_fallthru
      _
    // Predicated region
    $region26: #{tpu_custom_call.1} parent=1 // pred_check
      _
    $region27: #{tpu_custom_call.1} parent=1 // pred_check_branch
      %112 = sbr.rel (0) target = $region29
    $region28: #{tpu_custom_call.1} parent=1 // pred_region
      %s114 = ssub.s32 256, 256
      %115 = vsyncadd [#allocation5], %s114
      %s116 = sshll.u32 [#allocation8], 4
      %s117 = int_to_ptr.vmem [resolvable:$true] %s116
      %122 = dma.vmem_to_hbm [thread:$0]  %s117, 256, %s2, [#allocation5], 128, 128, 8
    $region29: #{tpu_custom_call.1} parent=1 // pred_fallthru
      _
    // Predicated region
    $region30: #{tpu_custom_call.1} parent=1 // pred_check
      _
    $region31: #{tpu_custom_call.1} parent=1 // pred_check_branch
      %124 = sbr.rel (0) target = $region33
    $region32: #{tpu_custom_call.1} parent=1 // pred_region
      %125 = dma.done [#allocation5], 256
    $region33: #{tpu_custom_call.1} parent=1 // pred_fallthru
      _
    %126 = vsyncpa [#allocation4], 1
    %127 = vsyncpa [#allocation7], 1
    %128 = vsyncpa [#allocation5], 1

</llo_original>
